<compile_context>
chip_gen: v5e
topology: v5e:2x2
jax: 0.10.0
libtpu: 0.0.40
codegen_flags: <defaults>
</compile_context>

<pallas_src>
import functools

import jax
import jax.numpy as jnp
from jax import lax
from jax.experimental import pallas as pl
from jax.experimental.pallas import tpu as pltpu

# Deterministic "parameters" from focalLoss.__init__(gamma=2, alpha=1)
GAMMA = 2.0
ALPHA = 1.0  # alpha vector = [alpha, 1 - alpha] = [1.0, 0.0]


def _focal_weight(one_m_pt, gamma):
    g = float(gamma)
    if g == 2.0:
        return one_m_pt * one_m_pt          # VPU mul, no EUP pow
    if g == 1.0:
        return one_m_pt
    if g == 0.0:
        return jnp.ones_like(one_m_pt)
    if g.is_integer() and g >= 0:
        return lax.integer_pow(one_m_pt, int(g))
    return one_m_pt ** jnp.float32(g)


def _pointwise_loss(x, tgt, class_axis, gamma, alpha0, alpha1):
    """x: f32 slab with classes on `class_axis`; tgt: int32 with size-1 class axis.

    Returns the per-pixel focal loss with the class axis reduced to size 1.
    Numerically stable (max-subtracted) log_softmax; target gather via one-hot.
    """
    m = jnp.max(x, axis=class_axis, keepdims=True)
    z = x - m
    e = jnp.exp(z)
    lse = jnp.log(jnp.sum(e, axis=class_axis, keepdims=True))
    cls = lax.broadcasted_iota(jnp.int32, x.shape, class_axis)
    onehot = (cls == tgt).astype(jnp.float32)
    log_t = jnp.sum(z * onehot, axis=class_axis, keepdims=True) - lse
    pt = jnp.exp(log_t)
    # at = [alpha, 1 - alpha][target]; binary targets {0,1}.  (torch's length-2 alpha
    # gather would raise for target >= 2; here any target != 0 maps to 1 - alpha.)
    at = jnp.where(tgt == 0, jnp.float32(alpha0), jnp.float32(alpha1))
    w = _focal_weight(1.0 - pt, gamma)
    return -w * (log_t * at)


def _focal_loss_nchw_kernel(pred_ref, tgt_ref, out_ref, acc_ref, *,
                            hw, gamma, alpha0, alpha1):
    """Grid = (N, HW_outer, HW_inner).

    pred_ref: (C, TILE)  -- classes on sublanes, pixels lane-dense
    tgt_ref:  (1, TILE)  int8
    out_ref:  (1, 128)   per-(batch, outer) partial sum
    acc_ref:  (1, TILE)  lane-dense scratch accumulator
    """
    o = pl.program_id(1)
    i = pl.program_id(2)
    last_o = pl.num_programs(1) - 1
    last_i = pl.num_programs(2) - 1
    _, tile = pred_ref.shape

    @pl.when(i == 0)
    def _():
        acc_ref[...] = jnp.zeros_like(acc_ref)

    x = pred_ref[...].astype(jnp.float32)            # (C, TILE)
    tgt = tgt_ref[...].astype(jnp.int32)             # (1, TILE)
    loss = _pointwise_loss(x, tgt, 0, gamma, alpha0, alpha1)   # (1, TILE)

    if hw % tile != 0:
        # Only the last *global* HW tile has out-of-bounds lanes (garbage / NaN);
        # keep them out of the accumulator with a select (never a multiply).
        is_last_tile = jnp.logical_and(o == last_o, i == last_i)

        @pl.when(jnp.logical_not(is_last_tile))
        def _():
            acc_ref[...] += loss

        @pl.when(is_last_tile)
        def _():
            lane = lax.broadcasted_iota(jnp.int32, (1, tile), 1)
            tile_idx = o * pl.num_programs(2) + i
            valid = (tile_idx * tile + lane) < hw
            acc_ref[...] += jnp.where(valid, loss, 0.0)
    else:
        acc_ref[...] += loss

    @pl.when(i == last_i)
    def _():
        # One cross-lane reduce per (batch, outer) group; lane-dense 128-wide store.
        out_ref[...] = jnp.zeros_like(out_ref) + jnp.sum(acc_ref[...])


def _focal_loss_rows_kernel(pred_ref, tgt_ref, out_ref, acc_ref, *,
                            m_rows, gamma, alpha0, alpha1):
    """(M, C) fallback.  Grid = (M_tiles,).

    pred_ref: (TM, C) -- rows on sublanes, classes on lanes (no wrapper transpose)
    tgt_ref:  (TM, 1) int8
    out_ref:  (1, 128)
    acc_ref:  (TM, 1) scratch accumulator
    """
    j = pl.program_id(0)
    last = pl.num_programs(0) - 1
    tm, _ = pred_ref.shape

    @pl.when(j == 0)
    def _():
        acc_ref[...] = jnp.zeros_like(acc_ref)

    x = pred_ref[...].astype(jnp.float32)            # (TM, C)
    tgt = tgt_ref[...].astype(jnp.int32)             # (TM, 1)
    loss = _pointwise_loss(x, tgt, 1, gamma, alpha0, alpha1)   # (TM, 1)

    if m_rows % tm != 0:
        @pl.when(j != last)
        def _():
            acc_ref[...] += loss

        @pl.when(j == last)
        def _():
            row = lax.broadcasted_iota(jnp.int32, (tm, 1), 0)
            valid = (j * tm + row) < m_rows
            acc_ref[...] += jnp.where(valid, loss, 0.0)
    else:
        acc_ref[...] += loss

    @pl.when(j == last)
    def _():
        out_ref[...] = jnp.zeros_like(out_ref) + jnp.sum(acc_ref[...])


def _focal_loss_nchw(pred3, tgt3, hw, gamma, alpha, max_block_bytes):
    n, c, _ = pred3.shape
    itemsize = jnp.dtype(pred3.dtype).itemsize
    # Budget counts the sublane-padded VMEM footprint of a prediction block so a
    # small C (< 8) doesn't silently double the real allocation.
    c_pad = ((c + 7) // 8) * 8
    lane_budget = max(128, (max_block_bytes // (c_pad * itemsize)) // 128 * 128)

    if hw < 128:
        # Tiny spatial extent: pad up to one 128-lane tile (negligible bytes).
        pad = 128 - hw
        pred3 = jnp.pad(pred3, ((0, 0), (0, 0), (0, pad)))
        tgt3 = jnp.pad(tgt3, ((0, 0), (0, 0), (0, pad)))
        tile = 128
    else:
        # Largest 128-multiple tile within the VMEM budget.  NO wrapper-side padding
        # of HW -- the last (partial) tile is handled by the in-kernel select mask.
        tile = min(lane_budget, (hw // 128) * 128)
    num_tiles = pl.cdiv(hw, tile)

    # Megacore: mark part of the HW-tile axis "parallel" too, so both v7x
    # TensorCores are busy even at N == 1 (no-op on single-core v5e/v6e).
    if num_tiles % 2 == 0:
        hw_outer, hw_inner = 2, num_tiles // 2
    else:
        hw_outer, hw_inner = 1, num_tiles

    kernel = functools.partial(
        _focal_loss_nchw_kernel, hw=hw, gamma=float(gamma),
        alpha0=float(alpha), alpha1=float(1.0 - alpha))

    partials = pl.pallas_call(
        kernel,
        out_shape=jax.ShapeDtypeStruct((n, hw_outer, 1, 128), jnp.float32),
        grid_spec=pltpu.PrefetchScalarGridSpec(
            num_scalar_prefetch=0,
            grid=(n, hw_outer, hw_inner),
            in_specs=[
                # predictions (N, C, HW): classes full-extent on sublanes, pixels on lanes
                pl.BlockSpec((None, c, tile),
                             lambda b, o, i: (b, 0, o * hw_inner + i)),
                # int8 targets (N, 1, HW): 1/4 the HBM bytes of int32
                pl.BlockSpec((None, 1, tile),
                             lambda b, o, i: (b, 0, o * hw_inner + i)),
            ],
            # per-(batch, outer) partial sums, resident across the inner reduction axis
            out_specs=pl.BlockSpec((None, None, 1, 128),
                                   lambda b, o, i: (b, o, 0, 0)),
            scratch_shapes=[pltpu.VMEM((1, tile), jnp.float32)],
        ),
        compiler_params=pltpu.CompilerParams(
            dimension_semantics=("parallel", "parallel", "arbitrary")),
    )(pred3, tgt3)

    # Each (batch, outer) group wrote its partial broadcast over 128 lanes; take lane 0.
    return jnp.sum(partials[:, :, 0, 0])


def _focal_loss_rows(pred2, tgt2, gamma, alpha, max_block_bytes):
    m_rows, c = pred2.shape
    itemsize = jnp.dtype(pred2.dtype).itemsize
    c_lanes = ((c + 127) // 128) * 128   # lane padding of the (TM, C) block in VMEM
    row_budget = max(8, (max_block_bytes // (c_lanes * itemsize)) // 8 * 8)

    if m_rows < 8:
        pad = 8 - m_rows
        pred2 = jnp.pad(pred2, ((0, pad), (0, 0)))
        tgt2 = jnp.pad(tgt2, ((0, pad), (0, 0)))
        tm = 8
    else:
        tm = min(row_budget, (m_rows // 8) * 8)
    num_tiles = pl.cdiv(m_rows, tm)

    kernel = functools.partial(
        _focal_loss_rows_kernel, m_rows=m_rows, gamma=float(gamma),
        alpha0=float(alpha), alpha1=float(1.0 - alpha))

    out = pl.pallas_call(
        kernel,
        out_shape=jax.ShapeDtypeStruct((1, 128), jnp.float32),
        grid_spec=pltpu.PrefetchScalarGridSpec(
            num_scalar_prefetch=0,
            grid=(num_tiles,),
            in_specs=[
                pl.BlockSpec((tm, c), lambda j: (j, 0)),
                pl.BlockSpec((tm, 1), lambda j: (j, 0)),
            ],
            out_specs=pl.BlockSpec((1, 128), lambda j: (0, 0)),
            scratch_shapes=[pltpu.VMEM((tm, 1), jnp.float32)],
        ),
        compiler_params=pltpu.CompilerParams(
            dimension_semantics=("arbitrary",)),
    )(pred2, tgt2)
    return out[0, 0]


def focal_loss(predictions, targets, gamma=GAMMA, alpha=ALPHA,
               max_block_bytes=3 * 1024 * 1024):
    """predictions: (N, C, H, W) (or (M, C)); targets: integer class ids in {0, 1}.

    Note: targets >= 2 map to (1 - alpha) instead of raising like torch's length-2
    alpha gather -- a behavioral deviation only for non-binary targets.
    """
    predictions = jnp.asarray(predictions)
    targets = jnp.asarray(targets)

    if predictions.ndim > 2:
        n, c = predictions.shape[0], predictions.shape[1]
        pred3 = predictions.reshape(n, c, -1)        # (N, C, HW) -- no transpose, no pad
        hw = pred3.shape[2]
        tgt3 = targets.reshape(n, 1, hw).astype(jnp.int8)
        return _focal_loss_nchw(pred3, tgt3, hw, gamma, alpha, max_block_bytes)

    # (M, C) fallback: rows on sublanes, classes on lanes -- no wrapper-side transpose.
    m_rows = predictions.shape[0]
    tgt2 = targets.reshape(m_rows, 1).astype(jnp.int8)
    return _focal_loss_rows(predictions, tgt2, gamma, alpha, max_block_bytes)


if __name__ == "__main__":
    def reference(pred, tgt, gamma=GAMMA, alpha=ALPHA):
        # Pure-JAX reference, same math path as the torch module.
        pred = jnp.asarray(pred, jnp.float32)
        if pred.ndim > 2:
            n, c = pred.shape[0], pred.shape[1]
            pred = pred.reshape(n, c, -1).transpose(0, 2, 1).reshape(-1, c)
        tt = jnp.asarray(tgt).reshape(-1).astype(jnp.int32)
        logp = jax.nn.log_softmax(pred, axis=1)
        log_t = jnp.take_along_axis(logp, tt[:, None], axis=1)[:, 0]
        pt = jnp.exp(log_t)
        at = jnp.array([alpha, 1.0 - alpha], jnp.float32)[tt]
        return jnp.sum(-1.0 * (1.0 - pt) ** gamma * (log_t * at))

    key = jax.random.PRNGKey(0)
    k1, k2, k3, k4, k5, k6 = jax.random.split(key, 6)

    # Case 1: NCHW with HW a multiple of 128 (the common call shape).
    x1 = jax.random.normal(k1, (2, 4, 16, 16), dtype=jnp.float32)
    t1 = jax.random.randint(k2, (2, 16, 16), 0, 2, dtype=jnp.int32)
    l1 = focal_loss(x1, t1)
    jax.block_until_ready(l1)
    r1 = reference(x1, t1)
    assert jnp.allclose(l1, r1, rtol=1e-4, atol=1e-4), (l1, r1)

    # Case 2: NCHW with HW not lane-aligned -> exercises the no-pad partial-tile mask
    # and the (outer, inner) HW split used for the v7x megacore.
    x2 = jax.random.normal(k3, (1, 3, 12, 25), dtype=jnp.float32)
    t2 = jax.random.randint(k4, (1, 12, 25), 0, 2, dtype=jnp.int32)
    l2 = focal_loss(x2, t2)
    jax.block_until_ready(l2)
    r2 = reference(x2, t2)
    assert jnp.allclose(l2, r2, rtol=1e-4, atol=1e-4), (l2, r2)

    # Case 3: (M, C) fallback path (no wrapper-side transpose).
    x3 = jax.random.normal(k5, (50, 5), dtype=jnp.float32)
    t3 = jax.random.randint(k6, (50,), 0, 2, dtype=jnp.int32)
    l3 = focal_loss(x3, t3)
    jax.block_until_ready(l3)
    r3 = reference(x3, t3)
    assert jnp.allclose(l3, r3, rtol=1e-4, atol=1e-4), (l3, r3)

    print("KERNEL_OK")
</pallas_src>

<mosaic_0001>
module attributes {stable_mosaic.version = 11 : i64} {
  func.func @_focal_loss_nchw_kernel(%arg0: i32, %arg1: i32, %arg2: i32, %arg3: memref<1x4x256xf32, #tpu.memory_space<vmem>>, %arg4: memref<1x1x256xi8, #tpu.memory_space<vmem>>, %arg5: memref<1x1x1x128xf32, #tpu.memory_space<vmem>>, %arg6: memref<1x256xf32, #tpu.memory_space<vmem>>) attributes {dimension_semantics = [#tpu.dimension_semantics<parallel>, #tpu.dimension_semantics<parallel>, #tpu.dimension_semantics<arbitrary>], iteration_bounds = array<i64: 2, 1, 1>, scalar_prefetch = 0 : i64, scratch_operands = 1 : i64, tpu.core_type = #tpu.core_type<tc>, window_params = [{transform_indices = @transform_0, window_bounds = array<i64: 1, 4, 256>}, {transform_indices = @transform_1, window_bounds = array<i64: 1, 1, 256>}, {transform_indices = @transform_2, window_bounds = array<i64: 1, 1, 1, 128>}]} {
    %c0_i32 = arith.constant 0 : i32
    %0 = arith.cmpi eq, %arg2, %c0_i32 : i32
    %1 = arith.extui %0 : i1 to i32
    %c0_i32_0 = arith.constant 0 : i32
    %2 = arith.cmpi ne, %1, %c0_i32_0 : i32
    scf.if %2 {
      %cst_19 = arith.constant 0.000000e+00 : f32
      %44 = vector.broadcast %cst_19 : f32 to vector<1x256xf32>
      %c0_20 = arith.constant 0 : index
      %c0_21 = arith.constant 0 : index
      %45 = vector.load %arg6[%c0_20, %c0_21] : memref<1x256xf32, #tpu.memory_space<vmem>>, vector<1x256xf32>
      tpu.vector_store %arg6[%c0_20, %c0_21], %44 {strides = array<i32>} : memref<1x256xf32, #tpu.memory_space<vmem>>, vector<1x256xf32>,
    } else {
    }
    %c0 = arith.constant 0 : index
    %c0_1 = arith.constant 0 : index
    %c0_2 = arith.constant 0 : index
    %3 = vector.load %arg3[%c0, %c0_1, %c0_2] : memref<1x4x256xf32, #tpu.memory_space<vmem>>, vector<1x4x256xf32>
    %4 = vector.shape_cast %3 : vector<1x4x256xf32> to vector<4x256xf32>
    %c0_3 = arith.constant 0 : index
    %c0_4 = arith.constant 0 : index
    %c0_5 = arith.constant 0 : index
    %5 = vector.load %arg4[%c0_3, %c0_4, %c0_5] : memref<1x1x256xi8, #tpu.memory_space<vmem>>, vector<1x1x256xi8>
    %6 = vector.shape_cast %5 : vector<1x1x256xi8> to vector<1x256xi8>
    %7 = arith.extsi %6 : vector<1x256xi8> to vector<1x256xi32>
    %cst = arith.constant dense<0xFF800000> : vector<256xf32>
    %8 = vector.multi_reduction <maximumf>, %4, %cst [0] : vector<4x256xf32> to vector<256xf32>
    %9 = vector.shape_cast %8 : vector<256xf32> to vector<1x256xf32>
    %10 = vector.broadcast %9 : vector<1x256xf32> to vector<4x256xf32>
    %11 = arith.subf %4, %10 : vector<4x256xf32>
    %12 = math.exp %11 : vector<4x256xf32>
    %cst_6 = arith.constant dense<0.000000e+00> : vector<256xf32>
    %13 = vector.multi_reduction <add>, %12, %cst_6 [0] : vector<4x256xf32> to vector<256xf32>
    %14 = vector.shape_cast %13 : vector<256xf32> to vector<1x256xf32>
    %15 = math.log %14 : vector<1x256xf32>
    %16 = tpu.iota {dimensions = array<i32: 0>} : vector<4x256xi32>
    %17 = vector.broadcast %7 : vector<1x256xi32> to vector<4x256xi32>
    %18 = arith.cmpi eq, %16, %17 : vector<4x256xi32>
    %19 = arith.extui %18 : vector<4x256xi1> to vector<4x256xi32>
    %20 = arith.sitofp %19 : vector<4x256xi32> to vector<4x256xf32>
    %21 = arith.mulf %11, %20 : vector<4x256xf32>
    %cst_7 = arith.constant dense<0.000000e+00> : vector<256xf32>
    %22 = vector.multi_reduction <add>, %21, %cst_7 [0] : vector<4x256xf32> to vector<256xf32>
    %23 = vector.shape_cast %22 : vector<256xf32> to vector<1x256xf32>
    %24 = arith.subf %23, %15 : vector<1x256xf32>
    %25 = math.exp %24 : vector<1x256xf32>
    %c0_i32_8 = arith.constant 0 : i32
    %26 = vector.broadcast %c0_i32_8 : i32 to vector<1x256xi32>
    %27 = arith.cmpi eq, %7, %26 : vector<1x256xi32>
    %cst_9 = arith.constant 1.000000e+00 : f32
    %cst_10 = arith.constant 0.000000e+00 : f32
    %28 = vector.broadcast %cst_9 : f32 to vector<1x256xf32>
    %29 = vector.broadcast %cst_10 : f32 to vector<1x256xf32>
    %30 = arith.select %27, %28, %29 : vector<1x256xi1>, vector<1x256xf32>
    %cst_11 = arith.constant 1.000000e+00 : f32
    %31 = vector.broadcast %cst_11 : f32 to vector<1x256xf32>
    %32 = arith.subf %31, %25 : vector<1x256xf32>
    %33 = arith.mulf %32, %32 : vector<1x256xf32>
    %cst_12 = arith.constant 0.000000e+00 : f32
    %34 = vector.broadcast %cst_12 : f32 to vector<1x256xf32>
    %35 = arith.subf %34, %33 : vector<1x256xf32>
    %36 = arith.mulf %24, %30 : vector<1x256xf32>
    %37 = arith.mulf %35, %36 : vector<1x256xf32>
    %c0_13 = arith.constant 0 : index
    %c0_14 = arith.constant 0 : index
    %38 = vector.load %arg6[%c0_13, %c0_14] : memref<1x256xf32, #tpu.memory_space<vmem>>, vector<1x256xf32>
    %39 = arith.addf %38, %37 : vector<1x256xf32>
    %c0_15 = arith.constant 0 : index
    %c0_16 = arith.constant 0 : index
    %40 = vector.load %arg6[%c0_15, %c0_16] : memref<1x256xf32, #tpu.memory_space<vmem>>, vector<1x256xf32>
    tpu.vector_store %arg6[%c0_15, %c0_16], %39 {strides = array<i32>} : memref<1x256xf32, #tpu.memory_space<vmem>>, vector<1x256xf32>,
    %c0_i32_17 = arith.constant 0 : i32
    %41 = arith.cmpi eq, %arg2, %c0_i32_17 : i32
    %42 = arith.extui %41 : i1 to i32
    %c0_i32_18 = arith.constant 0 : i32
    %43 = arith.cmpi ne, %42, %c0_i32_18 : i32
    scf.if %43 {
      %cst_19 = arith.constant 0.000000e+00 : f32
      %44 = vector.broadcast %cst_19 : f32 to vector<1x128xf32>
      %c0_20 = arith.constant 0 : index
      %c0_21 = arith.constant 0 : index
      %45 = vector.load %arg6[%c0_20, %c0_21] : memref<1x256xf32, #tpu.memory_space<vmem>>, vector<1x256xf32>
      %46 = vector.shape_cast %45 : vector<1x256xf32> to vector<1x1x256xf32>
      %cst_22 = arith.constant dense<0.000000e+00> : vector<1xf32>
      %47 = vector.multi_reduction <add>, %46, %cst_22 [1, 2] : vector<1x1x256xf32> to vector<1xf32>
      %48 = vector.shape_cast %47 : vector<1xf32> to vector<1x1x1xf32>
      %49 = vector.extract %48[0, 0, 0] : f32 from vector<1x1x1xf32>
      %50 = vector.broadcast %49 : f32 to vector<1x128xf32>
      %51 = arith.addf %44, %50 : vector<1x128xf32>
      %c0_23 = arith.constant 0 : index
      %c0_24 = arith.constant 0 : index
      %c0_25 = arith.constant 0 : index
      %c0_26 = arith.constant 0 : index
      %52 = vector.load %arg5[%c0_23, %c0_24, %c0_25, %c0_26] : memref<1x1x1x128xf32, #tpu.memory_space<vmem>>, vector<1x1x1x128xf32>
      %53 = vector.shape_cast %52 : vector<1x1x1x128xf32> to vector<1x128xf32>
      %54 = vector.shape_cast %51 : vector<1x128xf32> to vector<1x1x1x128xf32>
      tpu.vector_store %arg5[%c0_23, %c0_24, %c0_25, %c0_26], %54 {strides = array<i32>} : memref<1x1x1x128xf32, #tpu.memory_space<vmem>>, vector<1x1x1x128xf32>,
    } else {
    }
    return
  }
  func.func @transform_0(%arg0: i32, %arg1: i32, %arg2: i32) -> (i32, i32, i32) {
    %c1_i32 = arith.constant 1 : i32
    %0 = arith.muli %arg1, %c1_i32 : i32
    %1 = arith.addi %0, %arg2 : i32
    %c0_i32 = arith.constant 0 : i32
    %c0_i32_0 = arith.constant 0 : i32
    return %arg0, %c0_i32, %1 : i32, i32, i32
  }
  func.func @transform_1(%arg0: i32, %arg1: i32, %arg2: i32) -> (i32, i32, i32) {
    %c1_i32 = arith.constant 1 : i32
    %0 = arith.muli %arg1, %c1_i32 : i32
    %1 = arith.addi %0, %arg2 : i32
    %c0_i32 = arith.constant 0 : i32
    %c0_i32_0 = arith.constant 0 : i32
    return %arg0, %c0_i32, %1 : i32, i32, i32
  }
  func.func @transform_2(%arg0: i32, %arg1: i32, %arg2: i32) -> (i32, i32, i32, i32) {
    %c0_i32 = arith.constant 0 : i32
    %c0_i32_0 = arith.constant 0 : i32
    %c0_i32_1 = arith.constant 0 : i32
    return %arg0, %arg1, %c0_i32, %c0_i32_0 : i32, i32, i32, i32
  }
}

</mosaic_0001>

<llo_original>
// kernel: tpu_custom_call.1
$region0: #{tpu_custom_call.1}
  #allocation0 [shape = 'u32[]', space=smem, size = 0x4, offset = 0x4, fixed_abs, tag = 'smem constant byte address 0x4 - core index']
  #allocation1 [shape = 'u32[72,128]{1,0:T(1,128)}', space=vmem, size = 0x9000, scoped, tag = 'internal scratch']
  #allocation2 [shape = 'f32[1,256]{1,0:T(1,128)}', space=vmem, size = 0x400, scoped, tag = 'scratch operand']
  %s0 = inlined_call_operand.hbm [shape: f32[2,4,256], index: 0, kind: input, shape index: {}]
  %s1 = inlined_call_operand.vmem [shape: s8[2,1,256], index: 1, kind: input, shape index: {}]
  %s2 = inlined_call_operand.hbm [shape: f32[2,1,1,128], index: 2, kind: output, shape index: {}]
  %s3 = sld [smem:[#allocation0]]
  $region53: #{tpu_custom_call.1} parent=0
    _
  %s5 = ssub.s32 1, %s3
  %s6 = scalar_select 0, %s5, %s3
  $region1: #{tpu_custom_call.1} parent=0
    #allocation3 [shape = 'u8[8192]{0}', space=vmem, size = 0x2000, scoped, tag = 'input window, operand 0']
    #allocation4 [shape = 's32[2]{0}', space=sflag, size = 0x8, scoped, tag = 'scoped memory for tpu_custom_call.1']
    #allocation5 [shape = 's32[2]{0}', space=sflag, size = 0x8, scoped, tag = 'scoped memory for tpu_custom_call.1']
    #allocation6 [shape = 'u8[1024]{0}', space=vmem, size = 0x400, scoped, tag = 'output window, operand 0']
    %7 = vsyncpa [#allocation4], 0
    %s8 = scalar_lea.sflag [#allocation4], 1
    %9 = vsyncpa %s8, 0
    %10 = vsyncpa [#allocation5], 0
    %s11 = scalar_lea.sflag [#allocation5], 1
    %12 = vsyncpa %s11, 0
    loop: start=0, step=1, limit=4
    $region2: #{tpu_custom_call.1} parent=1 // loop_pre_header
      _
    $region3: #{tpu_custom_call.1} parent=1 // loop_header
      %s14 = sphi 0, %s18
      %p15 = scmp.ge.s32.totalorder %s14, 4
      %s21 = sphi 0, %s40
      %s22 = sphi 0, %s36
      %s23 = sphi 0, %s32
      %s24 = sphi 0, %s21
      %s25 = sphi 0, %s22
      %s26 = sphi 0, %s23
      %s27 = sphi 0, %s24
      %s28 = sphi 0, %s25
      %s29 = sphi 0, %s26
      %s47 = sphi 0, %s49
      %s50 = sphi 0, %s47
      %s51 = sphi 0, %s50
      %s67 = sphi 0, %s51
      %s77 = sphi 0, %s79
      %s80 = sphi 0, %s77
      %s81 = sphi 0, %s80
      %s97 = sphi 0, %s81
      %s105 = sphi 0, %s107
      %s108 = sphi 0, %s105
      %s109 = sphi 0, %s108
      %s125 = sphi 0, %s109
    $region4: #{tpu_custom_call.1} parent=1 // loop_header_branch
      %17 = sbr.rel (%p15) target = $region8
    $region5: #{tpu_custom_call.1} parent=1 // loop_body
      %s19 = ssub.s32 %s14, 1
      %s20 = ssub.s32 %s14, 2
      %s30 = sadd.s32 1, %s23
      %p31 = scmp.ge.s32.totalorder %s30, 1
      %s32 = scalar_select %p31, 0, %s30
      %s33 = sadd.s32 1, %s22
      %s34 = scalar_select %p31, %s33, %s22
      %p35 = scmp.ge.s32.totalorder %s34, 1
      %s36 = scalar_select %p35, 0, %s34
      %s37 = sadd.s32 1, %s21
      %s38 = scalar_select %p35, %s37, %s21
      %p39 = scmp.ge.s32.totalorder %s38, 2
      %s40 = scalar_select %p39, 0, %s38
      %s41 = sadd.s32 %s22, %s23
      %s42 = sadd.s32 %s36, %s32
      %s43 = ssub.s32 %s21, %s40
      %s44 = ssub.s32 %s41, %s42
      %s45 = sor.u32 %s43, %s44
      %p46 = scmp.eq.s32.totalorder %s45, 0
      %s48 = sadd.s32 %s47, 1
      %s49 = scalar_select %p46, %s47, %s48
      %p52 = pneg %p46
      %p53 = scmp.eq.s32.totalorder %s14, 1
      %p54 = por %p52, %p53
      %p55 = scmp.ne.s32.totalorder %s47, %s50
      %p56 = scmp.eq.s32.totalorder %s14, 0
      %p57 = por %p55, %p56
      %p58 = scmp.ne.s32.totalorder %s47, %s50
      %p59 = scmp.eq.s32.totalorder %s19, 1
      %p60 = por %p58, %p59
      %p61 = scmp.ne.s32.totalorder %s50, %s51
      %p62 = scmp.eq.s32.totalorder %s19, 0
      %p63 = por %p61, %p62
      %p64 = scmp.ne.s32.totalorder %s50, %s51
      %p65 = scmp.eq.s32.totalorder %s20, 1
      %p66 = por %p64, %p65
      %p68 = scmp.ne.s32.totalorder %s51, %s67
      %p69 = scmp.eq.s32.totalorder %s20, 0
      %p70 = por %p68, %p69
      %s71 = sadd.s32 %s22, %s23
      %s72 = sadd.s32 %s36, %s32
      %s73 = ssub.s32 %s21, %s40
      %s74 = ssub.s32 %s71, %s72
      %s75 = sor.u32 %s73, %s74
      %p76 = scmp.eq.s32.totalorder %s75, 0
      %s78 = sadd.s32 %s77, 1
      %s79 = scalar_select %p76, %s77, %s78
      %p82 = pneg %p76
      %p83 = scmp.eq.s32.totalorder %s14, 1
      %p84 = por %p82, %p83
      %p85 = scmp.ne.s32.totalorder %s77, %s80
      %p86 = scmp.eq.s32.totalorder %s14, 0
      %p87 = por %p85, %p86
      %p88 = scmp.ne.s32.totalorder %s77, %s80
      %p89 = scmp.eq.s32.totalorder %s19, 1
      %p90 = por %p88, %p89
      %p91 = scmp.ne.s32.totalorder %s80, %s81
      %p92 = scmp.eq.s32.totalorder %s19, 0
      %p93 = por %p91, %p92
      %p94 = scmp.ne.s32.totalorder %s80, %s81
      %p95 = scmp.eq.s32.totalorder %s20, 1
      %p96 = por %p94, %p95
      %p98 = scmp.ne.s32.totalorder %s81, %s97
      %p99 = scmp.eq.s32.totalorder %s20, 0
      %p100 = por %p98, %p99
      %s101 = ssub.s32 %s21, %s40
      %s102 = ssub.s32 %s22, %s36
      %s103 = sor.u32 %s101, %s102
      %p104 = scmp.eq.s32.totalorder %s103, 0
      %s106 = sadd.s32 %s105, 1
      %s107 = scalar_select %p104, %s105, %s106
      %p110 = pneg %p104
      %p111 = scmp.eq.s32.totalorder %s14, 1
      %p112 = por %p110, %p111
      %p113 = scmp.ne.s32.totalorder %s105, %s108
      %p114 = scmp.eq.s32.totalorder %s14, 0
      %p115 = por %p113, %p114
      %p116 = scmp.ne.s32.totalorder %s105, %s108
      %p117 = scmp.eq.s32.totalorder %s19, 1
      %p118 = por %p116, %p117
      %p119 = scmp.ne.s32.totalorder %s108, %s109
      %p120 = scmp.eq.s32.totalorder %s19, 0
      %p121 = por %p119, %p120
      %p122 = scmp.ne.s32.totalorder %s108, %s109
      %p123 = scmp.eq.s32.totalorder %s20, 1
      %p124 = por %p122, %p123
      %p126 = scmp.ne.s32.totalorder %s109, %s125
      %p127 = scmp.eq.s32.totalorder %s20, 0
      %p128 = por %p126, %p127
      %p129 = scmp.le.s32.totalorder 1, %s14
      %p130 = scmp.lt.s32.totalorder %s14, 3
      %p131 = pnand %p129, %p130
      %p132 = pneg %p131
      // Predicated region
      $region9: #{tpu_custom_call.1} parent=5 // pred_check
        _
      $region10: #{tpu_custom_call.1} parent=5 // pred_check_branch
        %134 = sbr.rel (%p131) target = $region12
      $region11: #{tpu_custom_call.1} parent=5 // pred_region
        %s135 = ssub.s32 %s14, 1
      $region12: #{tpu_custom_call.1} parent=5 // pred_fallthru
        _
      %p136 = scmp.lt.s32.totalorder %s14, 2
      // Predicated region
      $region13: #{tpu_custom_call.1} parent=5 // pred_check
        %p137 = pneg %p136
      $region14: #{tpu_custom_call.1} parent=5 // pred_check_branch
        %139 = sbr.rel (%p137) target = $region16
      $region15: #{tpu_custom_call.1} parent=5 // pred_region
        // Predicated region
        $region17: #{tpu_custom_call.1} parent=15 // pred_check
          %p140 = pneg %p57
        $region18: #{tpu_custom_call.1} parent=15 // pred_check_branch
          %142 = sbr.rel (%p140) target = $region20
        $region19: #{tpu_custom_call.1} parent=15 // pred_region
          %s143 = sand.u32 %s47, 1
          %s144 = scalar_lea.sflag [#allocation4], %s143
          %s145 = sand.u32 %s47, 1
          %s146 = smul.addr %s145, 8
          %s147 = scalar_lea.vmem [#allocation3], %s146
          %s148 = sadd.s32 %s22, %s23
          %s149 = smul.u32 2, %s148
          %151 = vsyncadd %s144, 0
          %s152 = smul.addr %s21, 2
          %s153 = sadd.s32 %s149, %s152
          %s154 = smul.addr %s153, 4
          %s155 = scalar_lea.hbm %s0, %s154
          %s157 = sshll.u32 %s155, 4
          %s158 = int_to_ptr.hbm [resolvable:$true] %s157
          %s159 = sshll.u32 %s147, 4
          %s160 = int_to_ptr.vmem [resolvable:$true] %s159
          %162 = dma.hbm_to_vmem [thread:$0]  %s158, 128, %s160, %s144
        $region20: #{tpu_custom_call.1} parent=15 // pred_fallthru
          _
        // Predicated region
        $region21: #{tpu_custom_call.1} parent=15 // pred_check
          %p163 = pneg %p87
        $region22: #{tpu_custom_call.1} parent=15 // pred_check_branch
          %165 = sbr.rel (%p163) target = $region24
        $region23: #{tpu_custom_call.1} parent=15 // pred_region
          %s166 = sadd.s32 %s22, %s23
          %s167 = smul.u32 2, %s166
          %p168 = scmp.lt.s32.totalorder %s21, 1
          %s169 = scalar_select %p168, %s21, 1
          %p170 = scmp.lt.s32.totalorder %s167, 1
          %s171 = scalar_select %p170, %s167, 1
          %s172 = smul.addr %s169, 2
          %s173 = sadd.s32 %s171, %s172
          %s174 = scalar_lea.vmem %s1, %s173
          %s175 = sadd.s32 %s22, %s23
          %s176 = smul.u32 2, %s175
        $region24: #{tpu_custom_call.1} parent=15 // pred_fallthru
          _
      $region16: #{tpu_custom_call.1} parent=5 // pred_fallthru
        _
      %p177 = scmp.le.s32.totalorder 1, %s14
      %p178 = scmp.lt.s32.totalorder %s14, 3
      %p179 = pnand %p177, %p178
      %p180 = pneg %p179
      // Predicated region
      $region25: #{tpu_custom_call.1} parent=5 // pred_check
        _
      $region26: #{tpu_custom_call.1} parent=5 // pred_check_branch
        %182 = sbr.rel (%p179) target = $region28
      $region27: #{tpu_custom_call.1} parent=5 // pred_region
        %s183 = ssub.s32 %s14, 1
        %s184 = sand.u32 %s50, 1
        %s185 = scalar_lea.sflag [#allocation4], %s184
        %s186 = sand.u32 %s50, 1
        %s187 = smul.addr %s186, 8
        %s188 = scalar_lea.vmem [#allocation3], %s187
        // Predicated region
        $region29: #{tpu_custom_call.1} parent=27 // pred_check
          %p189 = pneg %p63
        $region30: #{tpu_custom_call.1} parent=27 // pred_check_branch
          %191 = sbr.rel (%p189) target = $region32
        $region31: #{tpu_custom_call.1} parent=27 // pred_region
          %193 = dma.done %s185, 128
        $region32: #{tpu_custom_call.1} parent=27 // pred_fallthru
          _
        %s194 = sand.u32 %s50, 1
        %s195 = scalar_lea.sflag [#allocation4], %s194
        %s196 = sand.u32 %s50, 1
        %s197 = smul.addr %s196, 8
        %s198 = scalar_lea.vmem [#allocation3], %s197
        %p199 = pneg %p63
        %p200 = pneg %p60
        %s201 = sadd.s32 %s25, %s26
        %s202 = smul.u32 2, %s201
        %p203 = scmp.lt.s32.totalorder %s24, 1
        %s204 = scalar_select %p203, %s24, 1
        %p205 = scmp.lt.s32.totalorder %s202, 1
        %s206 = scalar_select %p205, %s202, 1
        %s207 = smul.addr %s204, 2
        %s208 = sadd.s32 %s206, %s207
        %s209 = scalar_lea.vmem %s1, %s208
        %p210 = pneg %p93
        %p211 = pneg %p90
        %p212 = pneg %p121
        %p213 = pneg %p118
        %s214 = sand.u32 %s108, 1
        %s215 = scalar_lea.sflag [#allocation5], %s214
        %s216 = sand.u32 %s108, 1
        %s217 = scalar_lea.vmem [#allocation6], %s216
        %s218 = sadd.s32 %s25, %s26
        %s219 = smul.u32 2, %s218
        %s220 = sadd.s32 %s25, %s26
        %s221 = smul.u32 2, %s220
        %p222 = scmp.lt.s32.totalorder %s24, 1
        %s223 = scalar_select %p222, %s24, 1
        %p224 = scmp.lt.s32.totalorder %s221, 1
        %s225 = scalar_select %p224, %s221, 1
        %s226 = smul.addr %s223, 2
        %s227 = sadd.s32 %s225, %s226
        %s228 = scalar_lea.vmem %s1, %s227
        %s229 = sadd.s32 %s25, %s26
        %s230 = smul.u32 2, %s229
        %p231 = scmp.eq.s32.totalorder %s26, 0
        // Predicated region
        $region33: #{tpu_custom_call.1} parent=27 // pred_check
          %p232 = pneg %p231
        $region34: #{tpu_custom_call.1} parent=27 // pred_check_branch
          %234 = sbr.rel (%p232) target = $region36
        $region35: #{tpu_custom_call.1} parent=27 // pred_region
          %v235 = vlaneseq
          %vm236 = vcmp.ge.s32.totalorder %v235, 0
          %vm237 = vcmp.lt.s32.totalorder %v235, 256
          %vm238 = vmand %vm236, %vm237
          %239 = vst.msk [vmem:[#allocation2] sm:$0x3] %vm238, 0.0
        $region36: #{tpu_custom_call.1} parent=27 // pred_fallthru
          _
        %v240 = vld [vmem:[%s188] sm:$0xff]
        %v241 = vld [vmem:[%s228] sm:$0x3]
        %v242 = vunpack.c.0.s8 %v241
        %244 = vst [vmem:[#allocation1] ss:$2 sm:$0xff] %v240
        %v245 = vld.sshfl [vmem:[#allocation1] sm:$0xff pattern:$0x75316420]
        %v246 = vld.sshfl [vmem:[#allocation1 + $0x8] sm:$0xff pattern:$0x75316420]
        %vm249 = vcmask 1043456
        %v250 = vsel %vm249, %v245, -inf
        %v251 = vrot.slane %v250, 4
        %v252 = vmax.f32 %v250, %v251
        %v253 = vrot.slane %v252, 2
        %v254 = vmax.f32 %v252, %v253
        %v255 = vrot.slane %v254, 1
        %v256 = vmax.f32 %v254, %v255
        %v257 = vsel %vm249, %v246, -inf
        %v258 = vrot.slane %v257, 4
        %v259 = vmax.f32 %v257, %v258
        %v260 = vrot.slane %v259, 2
        %v261 = vmax.f32 %v259, %v260
        %v262 = vrot.slane %v261, 1
        %v263 = vmax.f32 %v261, %v262
        %v266 = vrot.slane %v263, 4
        %v267 = vsel %vm249, %v256, %v266
        %v269 = vsub.f32 %v240, %v267
        %v270 = vmul.f32 %v269, 1.442695
        %v271 = vpow.pop %v270
        %273 = vst [vmem:[#allocation1] ss:$2 sm:$0xff] %v271
        %v274 = vld.sshfl [vmem:[#allocation1] sm:$0xff pattern:$0x75316420]
        %v275 = vld.sshfl [vmem:[#allocation1 + $0x8] sm:$0xff pattern:$0x75316420]
        %v278 = vsel %vm249, %v274, 0.0
        %v279 = vrot.slane %v278, 4
        %v280 = vadd.f32 %v278, %v279
        %v281 = vrot.slane %v280, 2
        %v282 = vadd.f32 %v280, %v281
        %v283 = vrot.slane %v282, 1
        %v284 = vadd.f32 %v282, %v283
        %v285 = vsel %vm249, %v275, 0.0
        %v286 = vrot.slane %v285, 4
        %v287 = vadd.f32 %v285, %v286
        %v288 = vrot.slane %v287, 2
        %v289 = vadd.f32 %v287, %v288
        %v290 = vrot.slane %v289, 1
        %v291 = vadd.f32 %v289, %v290
        %v292 = vlog2.pop %v284
        %v293 = vmul.f32 %v292, 0.6931472
        %v294 = vlog2.pop %v291
        %v295 = vmul.f32 %v294, 0.6931472
        %v296 = vlaneseq
        %v297 = vshrl.u32 %v296, 7
        %v298 = vperm.slane %v242, 0
        %v299 = vperm.slane %v242, 4
        %v300 = vperm.slane %v298, 0
        %v301 = vperm.slane %v299, 0
        %vm302 = vcmp.eq.s32.totalorder %v297, %v300
        %vm303 = vcmp.eq.s32.totalorder %v297, %v301
        %v304 = vsel %vm302, 1, 0
        %v305 = vsel %vm303, 1, 0
        %v306 = vcvt.s32.f32 %v304
        %v307 = vcvt.s32.f32 %v305
        %v310 = vrot.slane %v307, 4
        %v311 = vsel %vm249, %v306, %v310
        %v313 = vmul.f32 %v269, %v311
        %315 = vst [vmem:[#allocation1] ss:$2 sm:$0xff] %v313
        %v316 = vld.sshfl [vmem:[#allocation1] sm:$0xff pattern:$0x75316420]
        %v317 = vld.sshfl [vmem:[#allocation1 + $0x8] sm:$0xff pattern:$0x75316420]
        %v320 = vsel %vm249, %v316, 0.0
        %v321 = vrot.slane %v320, 4
        %v322 = vadd.f32 %v320, %v321
        %v323 = vrot.slane %v322, 2
        %v324 = vadd.f32 %v322, %v323
        %v325 = vrot.slane %v324, 1
        %v326 = vadd.f32 %v324, %v325
        %v327 = vsel %vm249, %v317, 0.0
        %v328 = vrot.slane %v327, 4
        %v329 = vadd.f32 %v327, %v328
        %v330 = vrot.slane %v329, 2
        %v331 = vadd.f32 %v329, %v330
        %v332 = vrot.slane %v331, 1
        %v333 = vadd.f32 %v331, %v332
        %v334 = vsub.f32 %v326, %v293
        %v335 = vsub.f32 %v333, %v295
        %v336 = vmul.f32 %v334, 1.442695
        %v337 = vpow.pop %v336
        %v338 = vmul.f32 %v335, 1.442695
        %v339 = vpow.pop %v338
        %vm340 = vcmp.eq.s32.totalorder %v242, 0
        %v341 = vsel %vm340, 1.0, 0.0
        %v342 = vsub.f32 1.0, %v337
        %v343 = vsub.f32 1.0, %v339
        %v344 = vmul.f32 %v342, %v342
        %v345 = vmul.f32 %v343, %v343
        %v346 = vsub.f32 0.0, %v344
        %v347 = vsub.f32 0.0, %v345
        %v349 = vperm.slane %v341, 0
        %v350 = vperm.slane %v341, 4
        %v353 = vmul.f32 %v334, %v349
        %v354 = vmul.f32 %v335, %v350
        %v355 = vmul.f32 %v346, %v353
        %v356 = vmul.f32 %v347, %v354
        %v357 = vld [vmem:[#allocation2] sm:$0x3]
        %v360 = vrot.slane %v356, 7
        %vm361 = vcmask 1040384
        %v362 = vsel %vm361, %v355, %v360
        %v364 = vadd.f32 %v357, %v362
        %v365 = vlaneseq
        %vm366 = vcmp.ge.s32.totalorder %v365, 0
        %vm367 = vcmp.lt.s32.totalorder %v365, 256
        %vm368 = vmand %vm366, %vm367
        %369 = vst.msk [vmem:[#allocation2] sm:$0x3] %vm368, %v364
        // Predicated region
        $region37: #{tpu_custom_call.1} parent=27 // pred_check
          %p370 = pneg %p231
        $region38: #{tpu_custom_call.1} parent=27 // pred_check_branch
          %372 = sbr.rel (%p370) target = $region40
        $region39: #{tpu_custom_call.1} parent=27 // pred_region
          %v373 = vld [vmem:[#allocation2] sm:$0x3]
          %v375 = vperm.slane %v373, 0
          %v376 = vperm.slane %v373, 1
          %v379 = vsel %vm361, %v375, 0.0
          %v380 = vsel %vm361, %v376, 0.0
          %v381 = vadd.f32 %v379, %v380
          %382 = vadd.xlane.f32.xlu0 %v381
          %v383 = vpop.xlane.xlu0 %382
          %v384 = vrot.slane %v383, 4
          %v385 = vadd.f32 %v383, %v384
          %v386 = vrot.slane %v385, 2
          %v387 = vadd.f32 %v385, %v386
          %v388 = vrot.slane %v387, 1
          %v389 = vadd.f32 %v387, %v388
          %s390 = vtos %v389
          %v391 = vstv %s390
          %v392 = vadd.f32 %v391, 0.0
          %393 = vst [vmem:[%s217] sm:$0x1] %v392
        $region40: #{tpu_custom_call.1} parent=27 // pred_fallthru
          _
        %s394 = sand.u32 %s108, 1
        %s395 = scalar_lea.sflag [#allocation5], %s394
        %s396 = sand.u32 %s108, 1
        %s397 = scalar_lea.vmem [#allocation6], %s396
        // Predicated region
        $region41: #{tpu_custom_call.1} parent=27 // pred_check
          %p398 = pneg %p118
        $region42: #{tpu_custom_call.1} parent=27 // pred_check_branch
          %400 = sbr.rel (%p398) target = $region44
        $region43: #{tpu_custom_call.1} parent=27 // pred_region
          %402 = vsyncadd %s395, 0
          %s403 = sadd.s32 %s25, %s24
          %s404 = scalar_lea.hbm %s2, %s403
          %s406 = sshll.u32 %s397, 4
          %s407 = int_to_ptr.vmem [resolvable:$true] %s406
          %s408 = sshll.u32 %s404, 4
          %s409 = int_to_ptr.hbm [resolvable:$true] %s408
          %411 = dma.vmem_to_hbm [thread:$0]  %s407, 16, %s409, %s395
        $region44: #{tpu_custom_call.1} parent=27 // pred_fallthru
          _
      $region28: #{tpu_custom_call.1} parent=5 // pred_fallthru
        _
      %p412 = scmp.le.s32.totalorder 2, %s14
      // Predicated region
      $region45: #{tpu_custom_call.1} parent=5 // pred_check
        %p413 = pneg %p412
      $region46: #{tpu_custom_call.1} parent=5 // pred_check_branch
        %415 = sbr.rel (%p413) target = $region48
      $region47: #{tpu_custom_call.1} parent=5 // pred_region
        %s416 = ssub.s32 %s14, 2
        // Predicated region
        $region49: #{tpu_custom_call.1} parent=47 // pred_check
          %p417 = pneg %p124
        $region50: #{tpu_custom_call.1} parent=47 // pred_check_branch
          %419 = sbr.rel (%p417) target = $region52
        $region51: #{tpu_custom_call.1} parent=47 // pred_region
          %s420 = sand.u32 %s109, 1
          %s421 = scalar_lea.sflag [#allocation5], %s420
          %s422 = sand.u32 %s109, 1
          %s423 = scalar_lea.vmem [#allocation6], %s422
          %425 = dma.done %s421, 16
        $region52: #{tpu_custom_call.1} parent=47 // pred_fallthru
          _
      $region48: #{tpu_custom_call.1} parent=5 // pred_fallthru
        _
    $region6: #{tpu_custom_call.1} parent=1 // loop_footer
      %s18 = sadd.s32 1, %s14
    $region7: #{tpu_custom_call.1} parent=1 // loop_footer_branch
      %13 = sbr.rel target = $region3
    $region8: #{tpu_custom_call.1} parent=1 // loop_exit
      _
    %426 = vsyncpa [#allocation4], 1
    %s427 = scalar_lea.sflag [#allocation4], 1
    %428 = vsyncpa %s427, 1
    %429 = vsyncpa [#allocation5], 1
    %s430 = scalar_lea.sflag [#allocation5], 1
    %431 = vsyncpa %s430, 1

</llo_original>
